<compile_context>
chip_gen: v5e
topology: v5e:2x2
jax: 0.10.0
libtpu: 0.0.40
codegen_flags: <defaults>
</compile_context>

<pallas_src>
import functools

import jax
import jax.numpy as jnp
from jax.experimental import pallas as pl
from jax.experimental.pallas import tpu as pltpu

LANES = 128
MAX_ROW_TILE = 2048   # (2048,128) f32 = 1 MiB/block; 2 inputs x 2 bufs = 4 MiB VMEM
NCORES = 2            # "parallel" axis: megacore split on v7x, harmless elsewhere


def _round_up(x: int, m: int) -> int:
    return (x + m - 1) // m * m


def _bce_kernel(yp_ref, yt_ref, acc_ref, *, row_tile, tiles_per_core, total_n):
    c = pl.program_id(0)      # core-split axis ("parallel")
    i = pl.program_id(1)      # row-tile sweep ("arbitrary" / reduction)

    @pl.when(i == 0)
    def _():
        acc_ref[...] = jnp.zeros_like(acc_ref)

    # Unclamped logical tile id. The input index_map clamps it so the DMA stays
    # in-bounds; the mask below uses the *unclamped* id, so clamped (duplicate)
    # tiles contribute exactly zero.
    tile = c * tiles_per_core + i
    row0 = tile * row_tile

    yp = yp_ref[...]
    yt = yt_ref[...]

    # term = yt*log(yp) + (1-yt)*log(1-yp), rewritten to save a mul + a sub.
    lp1 = jnp.log(yp)
    lp0 = jnp.log(1.0 - yp)
    term = lp0 + yt * (lp1 - lp0)

    # Mask everything past the real element count (row tail, lane tail, and
    # whole out-of-range tiles) -- no wrapper padding / post-correction needed.
    row_ids = jax.lax.broadcasted_iota(jnp.int32, (row_tile, LANES), 0)
    lane_ids = jax.lax.broadcasted_iota(jnp.int32, (row_tile, LANES), 1)
    flat_idx = (row0 + row_ids) * LANES + lane_ids
    term = jnp.where(flat_idx < total_n, term, 0.0)

    # Fold (row_tile,128) -> (8,128) with cheap VPU vreg adds; the expensive
    # cross-lane reduce is deferred to a single tiny jnp.sum in the wrapper.
    partial = term.reshape(row_tile // 8, 8, LANES).sum(axis=0)
    acc_ref[...] += partial


def custom_bce_loss(y_pred: jax.Array, y_true: jax.Array) -> jax.Array:
    """Pallas-backed equivalent of CustomBCELoss.forward. Returns a scalar."""
    assert y_pred.shape == y_true.shape
    total_n = y_pred.size

    flat_p = y_pred.astype(jnp.float32).reshape(-1)
    flat_t = y_true.astype(jnp.float32).reshape(-1)

    # Only pad in the rare case where we cannot even form a (rows,128) slab
    # with rows >= 8; padded elements are masked out in-kernel.
    padded_n = max(_round_up(total_n, LANES), 8 * LANES)
    if padded_n != total_n:
        pad = padded_n - total_n
        flat_p = jnp.concatenate([flat_p, jnp.full((pad,), 0.5, jnp.float32)])
        flat_t = jnp.concatenate([flat_t, jnp.zeros((pad,), jnp.float32)])

    rows = padded_n // LANES
    yp2 = flat_p.reshape(rows, LANES)
    yt2 = flat_t.reshape(rows, LANES)

    # Largest sublane-aligned tile that never exceeds the array's row extent.
    row_tile = min(MAX_ROW_TILE, (rows // 8) * 8)
    num_tiles = pl.cdiv(rows, row_tile)
    tiles_per_core = pl.cdiv(num_tiles, NCORES)

    def in_index(c, i):
        # Clamp so the DMA never targets a block past the end of the array;
        # the kernel's mask zeroes the duplicated tile's contribution.
        t = jnp.minimum(c * tiles_per_core + i, num_tiles - 1)
        return (t, 0)

    kernel = functools.partial(
        _bce_kernel,
        row_tile=row_tile,
        tiles_per_core=tiles_per_core,
        total_n=total_n,
    )

    partials = pl.pallas_call(
        kernel,
        out_shape=jax.ShapeDtypeStruct((NCORES, 8, LANES), jnp.float32),
        grid_spec=pltpu.PrefetchScalarGridSpec(
            num_scalar_prefetch=0,
            grid=(NCORES, tiles_per_core),
            in_specs=[
                pl.BlockSpec((row_tile, LANES), in_index),
                pl.BlockSpec((row_tile, LANES), in_index),
            ],
            out_specs=pl.BlockSpec((None, 8, LANES), lambda c, i: (c, 0, 0)),
        ),
        compiler_params=pltpu.CompilerParams(
            dimension_semantics=("parallel", "arbitrary")),
    )(yp2, yt2)

    # Single final cross-lane reduce (tiny: NCORES*8*128 elements), negate, mean.
    return -jnp.sum(partials) / jnp.float32(total_n)


def _reference(y_pred, y_true):
    return -jnp.mean(y_true * jnp.log(y_pred) + (1 - y_true) * jnp.log(1 - y_pred))


if __name__ == "__main__":
    key = jax.random.PRNGKey(0)
    k1, k2 = jax.random.split(key)

    # NCHW inputs, like a segmentation-style prediction/target pair.
    shape = (2, 4, 16, 16)
    # y_pred: probabilities strictly in (0, 1) so log() is finite.
    y_pred = jax.nn.sigmoid(jax.random.normal(k1, shape, dtype=jnp.float32))
    y_pred = jnp.clip(y_pred, 1e-4, 1.0 - 1e-4)
    # y_true: hard 0/1 labels.
    y_true = (jax.random.uniform(k2, shape) > 0.5).astype(jnp.float32)

    loss = custom_bce_loss(y_pred, y_true)
    loss = jax.block_until_ready(loss)

    ref = _reference(y_pred, y_true)
    assert jnp.allclose(loss, ref, rtol=1e-5, atol=1e-5), (loss, ref)
    print("KERNEL_OK")
</pallas_src>

<mosaic_0001>
module attributes {stable_mosaic.version = 11 : i64} {
  func.func @_bce_kernel(%arg0: i32, %arg1: i32, %arg2: memref<16x128xf32, #tpu.memory_space<vmem>>, %arg3: memref<16x128xf32, #tpu.memory_space<vmem>>, %arg4: memref<1x8x128xf32, #tpu.memory_space<vmem>>) attributes {dimension_semantics = [#tpu.dimension_semantics<parallel>, #tpu.dimension_semantics<arbitrary>], iteration_bounds = array<i64: 2, 1>, scalar_prefetch = 0 : i64, scratch_operands = 0 : i64, tpu.core_type = #tpu.core_type<tc>, window_params = [{transform_indices = @transform_0, window_bounds = array<i64: 16, 128>}, {transform_indices = @transform_1, window_bounds = array<i64: 16, 128>}, {transform_indices = @transform_2, window_bounds = array<i64: 1, 8, 128>}]} {
    %c0_i32 = arith.constant 0 : i32
    %0 = arith.cmpi eq, %arg1, %c0_i32 : i32
    %1 = arith.extui %0 : i1 to i32
    %c0_i32_0 = arith.constant 0 : i32
    %2 = arith.cmpi ne, %1, %c0_i32_0 : i32
    scf.if %2 {
      %cst_12 = arith.constant 0.000000e+00 : f32
      %34 = vector.broadcast %cst_12 : f32 to vector<8x128xf32>
      %c0_13 = arith.constant 0 : index
      %c0_14 = arith.constant 0 : index
      %c0_15 = arith.constant 0 : index
      %35 = vector.load %arg4[%c0_13, %c0_14, %c0_15] : memref<1x8x128xf32, #tpu.memory_space<vmem>>, vector<1x8x128xf32>
      %36 = vector.shape_cast %35 : vector<1x8x128xf32> to vector<8x128xf32>
      %37 = vector.shape_cast %34 : vector<8x128xf32> to vector<1x8x128xf32>
      tpu.vector_store %arg4[%c0_13, %c0_14, %c0_15], %37 {strides = array<i32>} : memref<1x8x128xf32, #tpu.memory_space<vmem>>, vector<1x8x128xf32>,
    } else {
    }
    %c1_i32 = arith.constant 1 : i32
    %3 = arith.muli %arg0, %c1_i32 : i32
    %4 = arith.addi %3, %arg1 : i32
    %c16_i32 = arith.constant 16 : i32
    %5 = arith.muli %4, %c16_i32 : i32
    %c0 = arith.constant 0 : index
    %c0_1 = arith.constant 0 : index
    %6 = vector.load %arg2[%c0, %c0_1] : memref<16x128xf32, #tpu.memory_space<vmem>>, vector<16x128xf32>
    %c0_2 = arith.constant 0 : index
    %c0_3 = arith.constant 0 : index
    %7 = vector.load %arg3[%c0_2, %c0_3] : memref<16x128xf32, #tpu.memory_space<vmem>>, vector<16x128xf32>
    %8 = math.log %6 : vector<16x128xf32>
    %cst = arith.constant 1.000000e+00 : f32
    %9 = vector.broadcast %cst : f32 to vector<16x128xf32>
    %10 = arith.subf %9, %6 : vector<16x128xf32>
    %11 = math.log %10 : vector<16x128xf32>
    %12 = arith.subf %8, %11 : vector<16x128xf32>
    %13 = arith.mulf %7, %12 : vector<16x128xf32>
    %14 = arith.addf %11, %13 : vector<16x128xf32>
    %15 = tpu.iota {dimensions = array<i32: 0>} : vector<16x128xi32>
    %16 = tpu.iota {dimensions = array<i32: 1>} : vector<16x128xi32>
    %17 = vector.broadcast %5 : i32 to vector<16x128xi32>
    %18 = arith.addi %17, %15 : vector<16x128xi32>
    %c128_i32 = arith.constant 128 : i32
    %19 = vector.broadcast %c128_i32 : i32 to vector<16x128xi32>
    %20 = arith.muli %18, %19 : vector<16x128xi32>
    %21 = arith.addi %20, %16 : vector<16x128xi32>
    %c2048_i32 = arith.constant 2048 : i32
    %22 = vector.broadcast %c2048_i32 : i32 to vector<16x128xi32>
    %23 = arith.cmpi slt, %21, %22 : vector<16x128xi32>
    %cst_4 = arith.constant 0.000000e+00 : f32
    %24 = vector.broadcast %cst_4 : f32 to vector<16x128xf32>
    %25 = arith.select %23, %14, %24 : vector<16x128xi1>, vector<16x128xf32>
    %26 = vector.shape_cast %25 : vector<16x128xf32> to vector<2x8x128xf32>
    %cst_5 = arith.constant dense<0.000000e+00> : vector<8x128xf32>
    %27 = vector.multi_reduction <add>, %26, %cst_5 [0] : vector<2x8x128xf32> to vector<8x128xf32>
    %c0_6 = arith.constant 0 : index
    %c0_7 = arith.constant 0 : index
    %c0_8 = arith.constant 0 : index
    %28 = vector.load %arg4[%c0_6, %c0_7, %c0_8] : memref<1x8x128xf32, #tpu.memory_space<vmem>>, vector<1x8x128xf32>
    %29 = vector.shape_cast %28 : vector<1x8x128xf32> to vector<8x128xf32>
    %30 = arith.addf %29, %27 : vector<8x128xf32>
    %c0_9 = arith.constant 0 : index
    %c0_10 = arith.constant 0 : index
    %c0_11 = arith.constant 0 : index
    %31 = vector.load %arg4[%c0_9, %c0_10, %c0_11] : memref<1x8x128xf32, #tpu.memory_space<vmem>>, vector<1x8x128xf32>
    %32 = vector.shape_cast %31 : vector<1x8x128xf32> to vector<8x128xf32>
    %33 = vector.shape_cast %30 : vector<8x128xf32> to vector<1x8x128xf32>
    tpu.vector_store %arg4[%c0_9, %c0_10, %c0_11], %33 {strides = array<i32>} : memref<1x8x128xf32, #tpu.memory_space<vmem>>, vector<1x8x128xf32>,
    return
  }
  func.func @transform_0(%arg0: i32, %arg1: i32) -> (i32, i32) {
    %c1_i32 = arith.constant 1 : i32
    %0 = arith.muli %arg0, %c1_i32 : i32
    %1 = arith.addi %0, %arg1 : i32
    %c0_i32 = arith.constant 0 : i32
    %2 = arith.minsi %1, %c0_i32 : i32
    %c0_i32_0 = arith.constant 0 : i32
    %c0_i32_1 = arith.constant 0 : i32
    return %2, %c0_i32_0 : i32, i32
  }
  func.func @transform_1(%arg0: i32, %arg1: i32) -> (i32, i32) {
    %c1_i32 = arith.constant 1 : i32
    %0 = arith.muli %arg0, %c1_i32 : i32
    %1 = arith.addi %0, %arg1 : i32
    %c0_i32 = arith.constant 0 : i32
    %2 = arith.minsi %1, %c0_i32 : i32
    %c0_i32_0 = arith.constant 0 : i32
    %c0_i32_1 = arith.constant 0 : i32
    return %2, %c0_i32_0 : i32, i32
  }
  func.func @transform_2(%arg0: i32, %arg1: i32) -> (i32, i32, i32) {
    %c0_i32 = arith.constant 0 : i32
    %c0_i32_0 = arith.constant 0 : i32
    %c0_i32_1 = arith.constant 0 : i32
    return %arg0, %c0_i32, %c0_i32_0 : i32, i32, i32
  }
}

</mosaic_0001>

<llo_original>
// kernel: tpu_custom_call.1
$region0: #{tpu_custom_call.1}
  #allocation0 [shape = 'u32[]', space=smem, size = 0x4, offset = 0x4, fixed_abs, tag = 'smem constant byte address 0x4 - core index']
  #allocation1 [shape = 'u32[72,128]{1,0:T(1,128)}', space=vmem, size = 0x9000, scoped, tag = 'internal scratch']
  %s0 = inlined_call_operand.hbm [shape: f32[16,128], index: 0, kind: input, shape index: {}]
  %s1 = inlined_call_operand.hbm [shape: f32[16,128], index: 1, kind: input, shape index: {}]
  %s2 = inlined_call_operand.hbm [shape: f32[2,8,128], index: 2, kind: output, shape index: {}]
  %s3 = sld [smem:[#allocation0]]
  $region53: #{tpu_custom_call.1} parent=0
    _
  %s5 = ssub.s32 1, %s3
  %s6 = scalar_select 0, %s5, %s3
  $region1: #{tpu_custom_call.1} parent=0
    #allocation2 [shape = 'u8[16384]{0}', space=vmem, size = 0x4000, scoped, tag = 'input window, operand 0']
    #allocation3 [shape = 's32[2]{0}', space=sflag, size = 0x8, scoped, tag = 'scoped memory for tpu_custom_call.1']
    #allocation4 [shape = 's32[2]{0}', space=sflag, size = 0x8, scoped, tag = 'scoped memory for tpu_custom_call.1']
    #allocation5 [shape = 'u8[16384]{0}', space=vmem, size = 0x4000, scoped, tag = 'input window, operand 1']
    #allocation6 [shape = 's32[2]{0}', space=sflag, size = 0x8, scoped, tag = 'scoped memory for tpu_custom_call.1']
    #allocation7 [shape = 'u8[8192]{0}', space=vmem, size = 0x2000, scoped, tag = 'output window, operand 0']
    %7 = vsyncpa [#allocation3], 0
    %s8 = scalar_lea.sflag [#allocation3], 1
    %9 = vsyncpa %s8, 0
    %10 = vsyncpa [#allocation6], 0
    %s11 = scalar_lea.sflag [#allocation6], 1
    %12 = vsyncpa %s11, 0
    %13 = vsyncpa [#allocation4], 0
    %s14 = scalar_lea.sflag [#allocation4], 1
    %15 = vsyncpa %s14, 0
    loop: start=0, step=1, limit=4
    $region2: #{tpu_custom_call.1} parent=1 // loop_pre_header
      _
    $region3: #{tpu_custom_call.1} parent=1 // loop_header
      %s17 = sphi 0, %s21
      %p18 = scmp.ge.s32.totalorder %s17, 4
      %s24 = sphi 0, %s36
      %s25 = sphi 0, %s32
      %s26 = sphi 0, %s24
      %s27 = sphi 0, %s25
      %s28 = sphi 0, %s26
      %s29 = sphi 0, %s27
      %s45 = sphi 0, %s47
      %s48 = sphi 0, %s45
      %s49 = sphi 0, %s48
      %s65 = sphi 0, %s49
      %s77 = sphi 0, %s79
      %s80 = sphi 0, %s77
      %s81 = sphi 0, %s80
      %s97 = sphi 0, %s81
      %s103 = sphi 0, %s105
      %s106 = sphi 0, %s103
      %s107 = sphi 0, %s106
      %s123 = sphi 0, %s107
    $region4: #{tpu_custom_call.1} parent=1 // loop_header_branch
      %20 = sbr.rel (%p18) target = $region8
    $region5: #{tpu_custom_call.1} parent=1 // loop_body
      %s22 = ssub.s32 %s17, 1
      %s23 = ssub.s32 %s17, 2
      %s30 = sadd.s32 1, %s25
      %p31 = scmp.ge.s32.totalorder %s30, 1
      %s32 = scalar_select %p31, 0, %s30
      %s33 = sadd.s32 1, %s24
      %s34 = scalar_select %p31, %s33, %s24
      %p35 = scmp.ge.s32.totalorder %s34, 2
      %s36 = scalar_select %p35, 0, %s34
      %s37 = sadd.s32 %s24, %s25
      %p38 = scmp.lt.s32.totalorder %s37, 0
      %s39 = scalar_select %p38, %s37, 0
      %s40 = sadd.s32 %s36, %s32
      %p41 = scmp.lt.s32.totalorder %s40, 0
      %s42 = scalar_select %p41, %s40, 0
      %s43 = ssub.s32 %s39, %s42
      %p44 = scmp.eq.s32.totalorder %s43, 0
      %s46 = sadd.s32 %s45, 1
      %s47 = scalar_select %p44, %s45, %s46
      %p50 = pneg %p44
      %p51 = scmp.eq.s32.totalorder %s17, 1
      %p52 = por %p50, %p51
      %p53 = scmp.ne.s32.totalorder %s45, %s48
      %p54 = scmp.eq.s32.totalorder %s17, 0
      %p55 = por %p53, %p54
      %p56 = scmp.ne.s32.totalorder %s45, %s48
      %p57 = scmp.eq.s32.totalorder %s22, 1
      %p58 = por %p56, %p57
      %p59 = scmp.ne.s32.totalorder %s48, %s49
      %p60 = scmp.eq.s32.totalorder %s22, 0
      %p61 = por %p59, %p60
      %p62 = scmp.ne.s32.totalorder %s48, %s49
      %p63 = scmp.eq.s32.totalorder %s23, 1
      %p64 = por %p62, %p63
      %p66 = scmp.ne.s32.totalorder %s49, %s65
      %p67 = scmp.eq.s32.totalorder %s23, 0
      %p68 = por %p66, %p67
      %s69 = sadd.s32 %s24, %s25
      %p70 = scmp.lt.s32.totalorder %s69, 0
      %s71 = scalar_select %p70, %s69, 0
      %s72 = sadd.s32 %s36, %s32
      %p73 = scmp.lt.s32.totalorder %s72, 0
      %s74 = scalar_select %p73, %s72, 0
      %s75 = ssub.s32 %s71, %s74
      %p76 = scmp.eq.s32.totalorder %s75, 0
      %s78 = sadd.s32 %s77, 1
      %s79 = scalar_select %p76, %s77, %s78
      %p82 = pneg %p76
      %p83 = scmp.eq.s32.totalorder %s17, 1
      %p84 = por %p82, %p83
      %p85 = scmp.ne.s32.totalorder %s77, %s80
      %p86 = scmp.eq.s32.totalorder %s17, 0
      %p87 = por %p85, %p86
      %p88 = scmp.ne.s32.totalorder %s77, %s80
      %p89 = scmp.eq.s32.totalorder %s22, 1
      %p90 = por %p88, %p89
      %p91 = scmp.ne.s32.totalorder %s80, %s81
      %p92 = scmp.eq.s32.totalorder %s22, 0
      %p93 = por %p91, %p92
      %p94 = scmp.ne.s32.totalorder %s80, %s81
      %p95 = scmp.eq.s32.totalorder %s23, 1
      %p96 = por %p94, %p95
      %p98 = scmp.ne.s32.totalorder %s81, %s97
      %p99 = scmp.eq.s32.totalorder %s23, 0
      %p100 = por %p98, %p99
      %s101 = ssub.s32 %s24, %s36
      %p102 = scmp.eq.s32.totalorder %s101, 0
      %s104 = sadd.s32 %s103, 1
      %s105 = scalar_select %p102, %s103, %s104
      %p108 = pneg %p102
      %p109 = scmp.eq.s32.totalorder %s17, 1
      %p110 = por %p108, %p109
      %p111 = scmp.ne.s32.totalorder %s103, %s106
      %p112 = scmp.eq.s32.totalorder %s17, 0
      %p113 = por %p111, %p112
      %p114 = scmp.ne.s32.totalorder %s103, %s106
      %p115 = scmp.eq.s32.totalorder %s22, 1
      %p116 = por %p114, %p115
      %p117 = scmp.ne.s32.totalorder %s106, %s107
      %p118 = scmp.eq.s32.totalorder %s22, 0
      %p119 = por %p117, %p118
      %p120 = scmp.ne.s32.totalorder %s106, %s107
      %p121 = scmp.eq.s32.totalorder %s23, 1
      %p122 = por %p120, %p121
      %p124 = scmp.ne.s32.totalorder %s107, %s123
      %p125 = scmp.eq.s32.totalorder %s23, 0
      %p126 = por %p124, %p125
      %p127 = scmp.le.s32.totalorder 1, %s17
      %p128 = scmp.lt.s32.totalorder %s17, 3
      %p129 = pnand %p127, %p128
      %p130 = pneg %p129
      // Predicated region
      $region9: #{tpu_custom_call.1} parent=5 // pred_check
        _
      $region10: #{tpu_custom_call.1} parent=5 // pred_check_branch
        %132 = sbr.rel (%p129) target = $region12
      $region11: #{tpu_custom_call.1} parent=5 // pred_region
        %s133 = ssub.s32 %s17, 1
      $region12: #{tpu_custom_call.1} parent=5 // pred_fallthru
        _
      %p134 = scmp.lt.s32.totalorder %s17, 2
      // Predicated region
      $region13: #{tpu_custom_call.1} parent=5 // pred_check
        %p135 = pneg %p134
      $region14: #{tpu_custom_call.1} parent=5 // pred_check_branch
        %137 = sbr.rel (%p135) target = $region16
      $region15: #{tpu_custom_call.1} parent=5 // pred_region
        // Predicated region
        $region17: #{tpu_custom_call.1} parent=15 // pred_check
          %p138 = pneg %p55
        $region18: #{tpu_custom_call.1} parent=15 // pred_check_branch
          %140 = sbr.rel (%p138) target = $region20
        $region19: #{tpu_custom_call.1} parent=15 // pred_region
          %s141 = sand.u32 %s45, 1
          %s142 = scalar_lea.sflag [#allocation3], %s141
          %s143 = sand.u32 %s45, 1
          %s144 = smul.addr %s143, 16
          %s145 = scalar_lea.vmem [#allocation2], %s144
          %s146 = sadd.s32 %s24, %s25
          %p147 = scmp.lt.s32.totalorder %s146, 0
          %s148 = scalar_select %p147, %s146, 0
          %s149 = smul.u32 2, %s148
          %151 = vsyncadd %s142, 0
          %s152 = smul.addr %s149, 8
          %s153 = scalar_lea.hbm %s0, %s152
          %s154 = sshll.u32 %s153, 4
          %s155 = int_to_ptr.hbm [resolvable:$true] %s154
          %s156 = sshll.u32 %s145, 4
          %s157 = int_to_ptr.vmem [resolvable:$true] %s156
          %162 = dma.hbm_to_vmem [thread:$0]  %s155, 256, %s157, %s142, 128, 128, 8
        $region20: #{tpu_custom_call.1} parent=15 // pred_fallthru
          _
        // Predicated region
        $region21: #{tpu_custom_call.1} parent=15 // pred_check
          %p163 = pneg %p87
        $region22: #{tpu_custom_call.1} parent=15 // pred_check_branch
          %165 = sbr.rel (%p163) target = $region24
        $region23: #{tpu_custom_call.1} parent=15 // pred_region
          %s166 = sand.u32 %s77, 1
          %s167 = scalar_lea.sflag [#allocation6], %s166
          %s168 = sand.u32 %s77, 1
          %s169 = smul.addr %s168, 16
          %s170 = scalar_lea.vmem [#allocation5], %s169
          %s171 = sadd.s32 %s24, %s25
          %p172 = scmp.lt.s32.totalorder %s171, 0
          %s173 = scalar_select %p172, %s171, 0
          %s174 = smul.u32 2, %s173
          %176 = vsyncadd %s167, 0
          %s177 = smul.addr %s174, 8
          %s178 = scalar_lea.hbm %s1, %s177
          %s179 = sshll.u32 %s178, 4
          %s180 = int_to_ptr.hbm [resolvable:$true] %s179
          %s181 = sshll.u32 %s170, 4
          %s182 = int_to_ptr.vmem [resolvable:$true] %s181
          %187 = dma.hbm_to_vmem [thread:$0]  %s180, 256, %s182, %s167, 128, 128, 8
        $region24: #{tpu_custom_call.1} parent=15 // pred_fallthru
          _
      $region16: #{tpu_custom_call.1} parent=5 // pred_fallthru
        _
      %p188 = scmp.le.s32.totalorder 1, %s17
      %p189 = scmp.lt.s32.totalorder %s17, 3
      %p190 = pnand %p188, %p189
      %p191 = pneg %p190
      // Predicated region
      $region25: #{tpu_custom_call.1} parent=5 // pred_check
        _
      $region26: #{tpu_custom_call.1} parent=5 // pred_check_branch
        %193 = sbr.rel (%p190) target = $region28
      $region27: #{tpu_custom_call.1} parent=5 // pred_region
        %s194 = ssub.s32 %s17, 1
        %s195 = sand.u32 %s48, 1
        %s196 = scalar_lea.sflag [#allocation3], %s195
        %s197 = sand.u32 %s48, 1
        %s198 = smul.addr %s197, 16
        %s199 = scalar_lea.vmem [#allocation2], %s198
        // Predicated region
        $region29: #{tpu_custom_call.1} parent=27 // pred_check
          %p200 = pneg %p61
        $region30: #{tpu_custom_call.1} parent=27 // pred_check_branch
          %202 = sbr.rel (%p200) target = $region32
        $region31: #{tpu_custom_call.1} parent=27 // pred_region
          %204 = dma.done %s196, 256
        $region32: #{tpu_custom_call.1} parent=27 // pred_fallthru
          _
        %s205 = sand.u32 %s80, 1
        %s206 = scalar_lea.sflag [#allocation6], %s205
        %s207 = sand.u32 %s80, 1
        %s208 = smul.addr %s207, 16
        %s209 = scalar_lea.vmem [#allocation5], %s208
        // Predicated region
        $region33: #{tpu_custom_call.1} parent=27 // pred_check
          %p210 = pneg %p93
        $region34: #{tpu_custom_call.1} parent=27 // pred_check_branch
          %212 = sbr.rel (%p210) target = $region36
        $region35: #{tpu_custom_call.1} parent=27 // pred_region
          %214 = dma.done %s206, 256
        $region36: #{tpu_custom_call.1} parent=27 // pred_fallthru
          _
        %s215 = sand.u32 %s48, 1
        %s216 = scalar_lea.sflag [#allocation3], %s215
        %s217 = sand.u32 %s48, 1
        %s218 = smul.addr %s217, 16
        %s219 = scalar_lea.vmem [#allocation2], %s218
        %p220 = pneg %p61
        %p221 = pneg %p58
        %s222 = sand.u32 %s80, 1
        %s223 = scalar_lea.sflag [#allocation6], %s222
        %s224 = sand.u32 %s80, 1
        %s225 = smul.addr %s224, 16
        %s226 = scalar_lea.vmem [#allocation5], %s225
        %p227 = pneg %p93
        %p228 = pneg %p90
        %p229 = pneg %p119
        %p230 = pneg %p116
        %s231 = sand.u32 %s106, 1
        %s232 = scalar_lea.sflag [#allocation4], %s231
        %s233 = sand.u32 %s106, 1
        %s234 = smul.addr %s233, 8
        %s235 = scalar_lea.vmem [#allocation7], %s234
        %s236 = sadd.s32 %s26, %s27
        %p237 = scmp.lt.s32.totalorder %s236, 0
        %s238 = scalar_select %p237, %s236, 0
        %s239 = smul.u32 2, %s238
        %s240 = sadd.s32 %s26, %s27
        %p241 = scmp.lt.s32.totalorder %s240, 0
        %s242 = scalar_select %p241, %s240, 0
        %s243 = smul.u32 2, %s242
        %p244 = scmp.eq.s32.totalorder %s27, 0
        // Predicated region
        $region37: #{tpu_custom_call.1} parent=27 // pred_check
          %p245 = pneg %p244
        $region38: #{tpu_custom_call.1} parent=27 // pred_check_branch
          %247 = sbr.rel (%p245) target = $region40
        $region39: #{tpu_custom_call.1} parent=27 // pred_region
          %248 = vst [vmem:[%s235] sm:$0xff] 0.0
        $region40: #{tpu_custom_call.1} parent=27 // pred_fallthru
          _
        %s249 = sadd.s32 %s26, %s27
        %s250 = smul.u32 %s249, 16
        %v251 = vld [vmem:[%s199] sm:$0xff]
        %v252 = vld [vmem:[%s199 + $0x8] sm:$0xff]
        %v253 = vld [vmem:[%s209] sm:$0xff]
        %v254 = vld [vmem:[%s209 + $0x8] sm:$0xff]
        %v255 = vlog2.pop %v251
        %v256 = vmul.f32 %v255, 0.6931472
        %v257 = vlog2.pop %v252
        %v258 = vmul.f32 %v257, 0.6931472
        %v259 = vsub.f32 1.0, %v251
        %v260 = vsub.f32 1.0, %v252
        %v261 = vlog2.pop %v259
        %v262 = vmul.f32 %v261, 0.6931472
        %v263 = vlog2.pop %v260
        %v264 = vmul.f32 %v263, 0.6931472
        %v265 = vsub.f32 %v256, %v262
        %v266 = vsub.f32 %v258, %v264
        %v267 = vmul.f32 %v253, %v265
        %v268 = vmul.f32 %v254, %v266
        %v269 = vadd.f32 %v262, %v267
        %v270 = vadd.f32 %v264, %v268
        %v271 = vlaneseq
        %v272 = vshrl.u32 %v271, 7
        %v273 = vadd.s32 %v272, 8
        %v274 = vlaneseq
        %v275 = vand.u32 %v274, 127
        %v276 = vstv %s250
        %v277 = vadd.s32 %v276, %v272
        %v278 = vadd.s32 %v276, %v273
        %v279 = vmul.u32 %v277, 128
        %v280 = vmul.u32 %v278, 128
        %v281 = vadd.s32 %v279, %v275
        %v282 = vadd.s32 %v280, %v275
        %vm283 = vcmp.lt.s32.totalorder %v281, 2048
        %vm284 = vcmp.lt.s32.totalorder %v282, 2048
        %v285 = vsel %vm283, %v269, 0.0
        %v286 = vsel %vm284, %v270, 0.0
        %v287 = vadd.f32 %v285, %v286
        %v288 = vld [vmem:[%s235] sm:$0xff]
        %v289 = vadd.f32 %v288, %v287
        %290 = vst [vmem:[%s235] sm:$0xff] %v289
        %s291 = sand.u32 %s106, 1
        %s292 = scalar_lea.sflag [#allocation4], %s291
        %s293 = sand.u32 %s106, 1
        %s294 = smul.addr %s293, 8
        %s295 = scalar_lea.vmem [#allocation7], %s294
        // Predicated region
        $region41: #{tpu_custom_call.1} parent=27 // pred_check
          %p296 = pneg %p116
        $region42: #{tpu_custom_call.1} parent=27 // pred_check_branch
          %298 = sbr.rel (%p296) target = $region44
        $region43: #{tpu_custom_call.1} parent=27 // pred_region
          %300 = vsyncadd %s292, 0
          %s301 = smul.addr %s26, 8
          %s302 = scalar_lea.hbm %s2, %s301
          %s304 = sshll.u32 %s295, 4
          %s305 = int_to_ptr.vmem [resolvable:$true] %s304
          %s306 = sshll.u32 %s302, 4
          %s307 = int_to_ptr.hbm [resolvable:$true] %s306
          %309 = dma.vmem_to_hbm [thread:$0]  %s305, 128, %s307, %s292
        $region44: #{tpu_custom_call.1} parent=27 // pred_fallthru
          _
      $region28: #{tpu_custom_call.1} parent=5 // pred_fallthru
        _
      %p310 = scmp.le.s32.totalorder 2, %s17
      // Predicated region
      $region45: #{tpu_custom_call.1} parent=5 // pred_check
        %p311 = pneg %p310
      $region46: #{tpu_custom_call.1} parent=5 // pred_check_branch
        %313 = sbr.rel (%p311) target = $region48
      $region47: #{tpu_custom_call.1} parent=5 // pred_region
        %s314 = ssub.s32 %s17, 2
        // Predicated region
        $region49: #{tpu_custom_call.1} parent=47 // pred_check
          %p315 = pneg %p122
        $region50: #{tpu_custom_call.1} parent=47 // pred_check_branch
          %317 = sbr.rel (%p315) target = $region52
        $region51: #{tpu_custom_call.1} parent=47 // pred_region
          %s318 = sand.u32 %s107, 1
          %s319 = scalar_lea.sflag [#allocation4], %s318
          %s320 = sand.u32 %s107, 1
          %s321 = smul.addr %s320, 8
          %s322 = scalar_lea.vmem [#allocation7], %s321
          %324 = dma.done %s319, 128
        $region52: #{tpu_custom_call.1} parent=47 // pred_fallthru
          _
      $region48: #{tpu_custom_call.1} parent=5 // pred_fallthru
        _
    $region6: #{tpu_custom_call.1} parent=1 // loop_footer
      %s21 = sadd.s32 1, %s17
    $region7: #{tpu_custom_call.1} parent=1 // loop_footer_branch
      %16 = sbr.rel target = $region3
    $region8: #{tpu_custom_call.1} parent=1 // loop_exit
      _
    %325 = vsyncpa [#allocation3], 1
    %s326 = scalar_lea.sflag [#allocation3], 1
    %327 = vsyncpa %s326, 1
    %328 = vsyncpa [#allocation6], 1
    %s329 = scalar_lea.sflag [#allocation6], 1
    %330 = vsyncpa %s329, 1
    %331 = vsyncpa [#allocation4], 1
    %s332 = scalar_lea.sflag [#allocation4], 1
    %333 = vsyncpa %s332, 1

</llo_original>
